<compile_context>
chip_gen: v5e
topology: v5e:2x2
jax: 0.10.0
libtpu: 0.0.40
codegen_flags: <defaults>
</compile_context>

<pallas_src>
import functools

import jax
import jax.numpy as jnp
from jax.experimental import pallas as pl
from jax.experimental.pallas import tpu as pltpu


def _round_up(v, m):
    return (v + m - 1) // m * m


def _edge_loss_kernel(xm_ref, ym_ref, xt_ref, yt_ref, xb_ref, yb_ref, out_ref,
                      *, h, w, th, hh, wp):
    # xm/ym : (1, C, th, w)  main row tile of X and Y (native dtype)
    # xt/yt : (1, C, hh, w)  hh-row block just above the tile (halo source)
    # xb/yb : (1, C, hh, w)  hh-row block just below the tile (halo source)
    # out   : (1, 1, 8, 128) per-tile partial sum of squared Laplacian diffs
    f32 = jnp.float32
    t = pl.program_id(1)
    row0 = t * th                      # global row of this tile's first row
    c = xm_ref.shape[1]

    # conv(X) - conv(Y) == conv(X - Y); every input-channel slice of the fixed
    # weight is the same Laplacian, so the conv equals the single-channel
    # Laplacian stencil applied to the channel sum of the diff.
    d = xm_ref[0, 0].astype(f32) - ym_ref[0, 0].astype(f32)
    for ci in range(1, c):
        d = d + (xm_ref[0, ci].astype(f32) - ym_ref[0, ci].astype(f32))

    # Rows past the image (partial last tile -> unspecified DMA data) must act
    # as conv zero-padding and must never be selected (NaN-safe via where).
    rows = jax.lax.broadcasted_iota(jnp.int32, (th, w), 0) + row0
    d = jnp.where(rows < h, d, 0.0)

    # Halo rows: last row of the block above, first row of the block below.
    dtb = xt_ref[0, 0].astype(f32) - yt_ref[0, 0].astype(f32)
    dbb = xb_ref[0, 0].astype(f32) - yb_ref[0, 0].astype(f32)
    for ci in range(1, c):
        dtb = dtb + (xt_ref[0, ci].astype(f32) - yt_ref[0, ci].astype(f32))
        dbb = dbb + (xb_ref[0, ci].astype(f32) - yb_ref[0, ci].astype(f32))
    dt = dtb[hh - 1:hh]                # (1, w) global row row0-1 (if it exists)
    db = dbb[0:1]                      # (1, w) global row row0+th (if it exists)
    dt = jnp.where(row0 > 0, dt, 0.0)        # top image border -> zero pad
    db = jnp.where(row0 + th < h, db, 0.0)   # bottom image border -> zero pad

    # Extended rows [halo_top; tile; halo_bot]; lane-pad with >=2 zero columns
    # so the pltpu.roll wraparound only ever touches padding columns.
    d_ext = jnp.concatenate([dt, d, db], axis=0)                  # (th+2, w)
    d_ext = jnp.concatenate(
        [d_ext, jnp.zeros((th + 2, wp - w), f32)], axis=1)        # (th+2, wp)

    # Laplacian [[-1,-1,-1],[-1,8,-1],[-1,-1,-1]] == 9*center - 3x3 box sum.
    # Horizontal 3-tap via XLU rolls, vertical 3-tap via shifted row windows.
    r3 = d_ext + pltpu.roll(d_ext, 1, 1) + pltpu.roll(d_ext, wp - 1, 1)
    box3 = r3[0:th] + r3[1:th + 1] + r3[2:th + 2]
    lap = 9.0 * d_ext[1:th + 1] - box3                            # (th, wp)

    # Mask to the real image region, square.
    rows_p = jax.lax.broadcasted_iota(jnp.int32, (th, wp), 0) + row0
    cols_p = jax.lax.broadcasted_iota(jnp.int32, (th, wp), 1)
    sq = jnp.where((rows_p < h) & (cols_p < w), lap * lap, 0.0)

    # vreg-shaped partial reduction: fold 8-row groups, then 128-lane groups,
    # into one (8, 128) block.  VPU adds only — no cross-lane reduce/broadcast.
    thp = _round_up(th, 8)
    if thp != th:
        sq = jnp.concatenate([sq, jnp.zeros((thp - th, wp), f32)], axis=0)
    acc_rows = sq.reshape(thp // 8, 8, wp).sum(axis=0)            # (8, wp)
    acc = acc_rows[:, 0:128]
    for cb in range(1, wp // 128):
        acc = acc + acc_rows[:, cb * 128:(cb + 1) * 128]
    out_ref[...] = acc.reshape(1, 1, 8, 128)


def _choose_tile_rows(h, c, w, itemsize, target_bytes=2 * 1024 * 1024):
    # ~2 MiB per main input block: 2 tensors x 2 pipeline buffers ~ 8 MiB,
    # comfortably inside v5e's 16 MiB scoped default and v7x's 64 MiB VMEM,
    # while staying well above the per-grid-step-overhead regime on v6e.
    rows = target_bytes // max(1, c * w * itemsize)
    rows = max(8, (int(rows) // 8) * 8)
    return h if rows >= h else rows


def gradient_loss(x, y, tile_rows=None):
    assert x.shape == y.shape
    n, c, h, w = x.shape
    itemsize = jnp.dtype(x.dtype).itemsize

    if tile_rows is None:
        th = _choose_tile_rows(h, c, w, itemsize)
    else:
        th = max(8, (int(tile_rows) // 8) * 8)
        th = h if th >= h else th
    n_h = pl.cdiv(h, th)                 # last tile may be partial (masked)
    hh = 8 if h >= 8 else h              # halo-source block height
    tb = max(th // hh, 1)                # main-tile size in halo-block units
    max_hblk = pl.cdiv(h, hh) - 1
    wp = _round_up(w + 2, 128)           # in-VMEM lane padding only

    main_map = lambda b, t: (b, 0, t, 0)
    top_map = lambda b, t: (b, 0, jnp.maximum(t * tb - 1, 0), 0)
    bot_map = lambda b, t: (b, 0, jnp.minimum((t + 1) * tb, max_hblk), 0)

    kernel = functools.partial(_edge_loss_kernel, h=h, w=w, th=th, hh=hh, wp=wp)
    partials = pl.pallas_call(
        kernel,
        out_shape=jax.ShapeDtypeStruct((n, n_h, 8, 128), jnp.float32),
        grid=(n, n_h),
        in_specs=[
            pl.BlockSpec((1, c, th, w), main_map),   # X main tile
            pl.BlockSpec((1, c, th, w), main_map),   # Y main tile
            pl.BlockSpec((1, c, hh, w), top_map),    # X top-halo source rows
            pl.BlockSpec((1, c, hh, w), top_map),    # Y top-halo source rows
            pl.BlockSpec((1, c, hh, w), bot_map),    # X bottom-halo source rows
            pl.BlockSpec((1, c, hh, w), bot_map),    # Y bottom-halo source rows
        ],
        out_specs=pl.BlockSpec((1, 1, 8, 128), lambda b, t: (b, t, 0, 0)),
        compiler_params=pltpu.CompilerParams(
            dimension_semantics=("parallel", "parallel"),
            vmem_limit_bytes=32 * 1024 * 1024),
        cost_estimate=pl.CostEstimate(
            flops=(2 * c + 10) * n * h * w,
            transcendentals=0,
            bytes_accessed=2 * n * c * h * w * itemsize + 4 * n * n_h * 8 * 128),
    )(x, y, x, y, x, y)

    # Mean over the (N, 1, H, W) conv-output elements.
    return partials.sum() / (n * h * w)


def _reference_loss(x, y):
    # Pure-JAX reference (XLA conv) matching the PyTorch module exactly.
    c = x.shape[1]
    lap = jnp.array([[-1.0, -1.0, -1.0],
                     [-1.0,  8.0, -1.0],
                     [-1.0, -1.0, -1.0]], dtype=jnp.float32)
    wgt = jnp.broadcast_to(lap, (1, c, 3, 3))
    dn = jax.lax.conv_dimension_numbers(x.shape, wgt.shape, ("NCHW", "OIHW", "NCHW"))
    xc = jax.lax.conv_general_dilated(x, wgt, (1, 1), ((1, 1), (1, 1)),
                                      dimension_numbers=dn)
    yc = jax.lax.conv_general_dilated(y, wgt, (1, 1), ((1, 1), (1, 1)),
                                      dimension_numbers=dn)
    return jnp.mean((xc - yc) ** 2)


if __name__ == "__main__":
    key = jax.random.PRNGKey(0)
    kx, ky, k2x, k2y = jax.random.split(key, 4)

    # Channels must be 3 (module weight is fixed at (1, 3, 3, 3)).
    x = jax.random.normal(kx, (2, 3, 16, 16), dtype=jnp.float32)
    y = jax.random.normal(ky, (2, 3, 16, 16), dtype=jnp.float32)
    loss = gradient_loss(x, y)
    jax.block_until_ready(loss)
    ref = _reference_loss(x, y)
    assert jnp.allclose(loss, ref, rtol=1e-4, atol=1e-4), (loss, ref)

    # Also exercise the multi-row-tile path (halo blocks + partial last tile).
    x2 = jax.random.normal(k2x, (1, 3, 20, 16), dtype=jnp.float32)
    y2 = jax.random.normal(k2y, (1, 3, 20, 16), dtype=jnp.float32)
    loss2 = gradient_loss(x2, y2, tile_rows=8)
    jax.block_until_ready(loss2)
    ref2 = _reference_loss(x2, y2)
    assert jnp.allclose(loss2, ref2, rtol=1e-4, atol=1e-4), (loss2, ref2)

    print("KERNEL_OK")
</pallas_src>

<mosaic_0001>
module attributes {stable_mosaic.version = 11 : i64} {
  func.func @_edge_loss_kernel(%arg0: i32, %arg1: i32, %arg2: memref<1x3x16x16xf32, #tpu.memory_space<vmem>>, %arg3: memref<1x3x16x16xf32, #tpu.memory_space<vmem>>, %arg4: memref<1x3x8x16xf32, #tpu.memory_space<vmem>>, %arg5: memref<1x3x8x16xf32, #tpu.memory_space<vmem>>, %arg6: memref<1x3x8x16xf32, #tpu.memory_space<vmem>>, %arg7: memref<1x3x8x16xf32, #tpu.memory_space<vmem>>, %arg8: memref<1x1x8x128xf32, #tpu.memory_space<vmem>>) attributes {dimension_semantics = [#tpu.dimension_semantics<parallel>, #tpu.dimension_semantics<parallel>], iteration_bounds = array<i64: 2, 1>, scalar_prefetch = 0 : i64, scratch_operands = 0 : i64, tpu.core_type = #tpu.core_type<tc>, window_params = [{transform_indices = @transform_0, window_bounds = array<i64: 1, 3, 16, 16>}, {transform_indices = @transform_1, window_bounds = array<i64: 1, 3, 16, 16>}, {transform_indices = @transform_2, window_bounds = array<i64: 1, 3, 8, 16>}, {transform_indices = @transform_3, window_bounds = array<i64: 1, 3, 8, 16>}, {transform_indices = @transform_4, window_bounds = array<i64: 1, 3, 8, 16>}, {transform_indices = @transform_5, window_bounds = array<i64: 1, 3, 8, 16>}, {transform_indices = @transform_6, window_bounds = array<i64: 1, 1, 8, 128>}]} {
    %c16_i32 = arith.constant 16 : i32
    %0 = arith.muli %arg1, %c16_i32 : i32
    %c0 = arith.constant 0 : index
    %c0_0 = arith.constant 0 : index
    %c0_1 = arith.constant 0 : index
    %c0_2 = arith.constant 0 : index
    %1 = vector.load %arg2[%c0, %c0_0, %c0_1, %c0_2] : memref<1x3x16x16xf32, #tpu.memory_space<vmem>>, vector<1x1x16x16xf32>
    %2 = vector.shape_cast %1 : vector<1x1x16x16xf32> to vector<16x16xf32>
    %c0_3 = arith.constant 0 : index
    %c0_4 = arith.constant 0 : index
    %c0_5 = arith.constant 0 : index
    %c0_6 = arith.constant 0 : index
    %3 = vector.load %arg3[%c0_3, %c0_4, %c0_5, %c0_6] : memref<1x3x16x16xf32, #tpu.memory_space<vmem>>, vector<1x1x16x16xf32>
    %4 = vector.shape_cast %3 : vector<1x1x16x16xf32> to vector<16x16xf32>
    %5 = arith.subf %2, %4 : vector<16x16xf32>
    %c0_7 = arith.constant 0 : index
    %c1 = arith.constant 1 : index
    %c0_8 = arith.constant 0 : index
    %c0_9 = arith.constant 0 : index
    %6 = vector.load %arg2[%c0_7, %c1, %c0_8, %c0_9] : memref<1x3x16x16xf32, #tpu.memory_space<vmem>>, vector<1x1x16x16xf32>
    %7 = vector.shape_cast %6 : vector<1x1x16x16xf32> to vector<16x16xf32>
    %c0_10 = arith.constant 0 : index
    %c1_11 = arith.constant 1 : index
    %c0_12 = arith.constant 0 : index
    %c0_13 = arith.constant 0 : index
    %8 = vector.load %arg3[%c0_10, %c1_11, %c0_12, %c0_13] : memref<1x3x16x16xf32, #tpu.memory_space<vmem>>, vector<1x1x16x16xf32>
    %9 = vector.shape_cast %8 : vector<1x1x16x16xf32> to vector<16x16xf32>
    %10 = arith.subf %7, %9 : vector<16x16xf32>
    %11 = arith.addf %5, %10 : vector<16x16xf32>
    %c0_14 = arith.constant 0 : index
    %c2 = arith.constant 2 : index
    %c0_15 = arith.constant 0 : index
    %c0_16 = arith.constant 0 : index
    %12 = vector.load %arg2[%c0_14, %c2, %c0_15, %c0_16] : memref<1x3x16x16xf32, #tpu.memory_space<vmem>>, vector<1x1x16x16xf32>
    %13 = vector.shape_cast %12 : vector<1x1x16x16xf32> to vector<16x16xf32>
    %c0_17 = arith.constant 0 : index
    %c2_18 = arith.constant 2 : index
    %c0_19 = arith.constant 0 : index
    %c0_20 = arith.constant 0 : index
    %14 = vector.load %arg3[%c0_17, %c2_18, %c0_19, %c0_20] : memref<1x3x16x16xf32, #tpu.memory_space<vmem>>, vector<1x1x16x16xf32>
    %15 = vector.shape_cast %14 : vector<1x1x16x16xf32> to vector<16x16xf32>
    %16 = arith.subf %13, %15 : vector<16x16xf32>
    %17 = arith.addf %11, %16 : vector<16x16xf32>
    %18 = tpu.iota {dimensions = array<i32: 0>} : vector<16x16xi32>
    %19 = vector.broadcast %0 : i32 to vector<16x16xi32>
    %20 = arith.addi %18, %19 : vector<16x16xi32>
    %c16_i32_21 = arith.constant 16 : i32
    %21 = vector.broadcast %c16_i32_21 : i32 to vector<16x16xi32>
    %22 = arith.cmpi slt, %20, %21 : vector<16x16xi32>
    %cst = arith.constant 0.000000e+00 : f32
    %23 = vector.broadcast %cst : f32 to vector<16x16xf32>
    %24 = arith.select %22, %17, %23 : vector<16x16xi1>, vector<16x16xf32>
    %c0_22 = arith.constant 0 : index
    %c0_23 = arith.constant 0 : index
    %c0_24 = arith.constant 0 : index
    %c0_25 = arith.constant 0 : index
    %25 = vector.load %arg4[%c0_22, %c0_23, %c0_24, %c0_25] : memref<1x3x8x16xf32, #tpu.memory_space<vmem>>, vector<1x1x8x16xf32>
    %26 = vector.shape_cast %25 : vector<1x1x8x16xf32> to vector<8x16xf32>
    %c0_26 = arith.constant 0 : index
    %c0_27 = arith.constant 0 : index
    %c0_28 = arith.constant 0 : index
    %c0_29 = arith.constant 0 : index
    %27 = vector.load %arg5[%c0_26, %c0_27, %c0_28, %c0_29] : memref<1x3x8x16xf32, #tpu.memory_space<vmem>>, vector<1x1x8x16xf32>
    %28 = vector.shape_cast %27 : vector<1x1x8x16xf32> to vector<8x16xf32>
    %29 = arith.subf %26, %28 : vector<8x16xf32>
    %c0_30 = arith.constant 0 : index
    %c0_31 = arith.constant 0 : index
    %c0_32 = arith.constant 0 : index
    %c0_33 = arith.constant 0 : index
    %30 = vector.load %arg6[%c0_30, %c0_31, %c0_32, %c0_33] : memref<1x3x8x16xf32, #tpu.memory_space<vmem>>, vector<1x1x8x16xf32>
    %31 = vector.shape_cast %30 : vector<1x1x8x16xf32> to vector<8x16xf32>
    %c0_34 = arith.constant 0 : index
    %c0_35 = arith.constant 0 : index
    %c0_36 = arith.constant 0 : index
    %c0_37 = arith.constant 0 : index
    %32 = vector.load %arg7[%c0_34, %c0_35, %c0_36, %c0_37] : memref<1x3x8x16xf32, #tpu.memory_space<vmem>>, vector<1x1x8x16xf32>
    %33 = vector.shape_cast %32 : vector<1x1x8x16xf32> to vector<8x16xf32>
    %34 = arith.subf %31, %33 : vector<8x16xf32>
    %c0_38 = arith.constant 0 : index
    %c1_39 = arith.constant 1 : index
    %c0_40 = arith.constant 0 : index
    %c0_41 = arith.constant 0 : index
    %35 = vector.load %arg4[%c0_38, %c1_39, %c0_40, %c0_41] : memref<1x3x8x16xf32, #tpu.memory_space<vmem>>, vector<1x1x8x16xf32>
    %36 = vector.shape_cast %35 : vector<1x1x8x16xf32> to vector<8x16xf32>
    %c0_42 = arith.constant 0 : index
    %c1_43 = arith.constant 1 : index
    %c0_44 = arith.constant 0 : index
    %c0_45 = arith.constant 0 : index
    %37 = vector.load %arg5[%c0_42, %c1_43, %c0_44, %c0_45] : memref<1x3x8x16xf32, #tpu.memory_space<vmem>>, vector<1x1x8x16xf32>
    %38 = vector.shape_cast %37 : vector<1x1x8x16xf32> to vector<8x16xf32>
    %39 = arith.subf %36, %38 : vector<8x16xf32>
    %40 = arith.addf %29, %39 : vector<8x16xf32>
    %c0_46 = arith.constant 0 : index
    %c1_47 = arith.constant 1 : index
    %c0_48 = arith.constant 0 : index
    %c0_49 = arith.constant 0 : index
    %41 = vector.load %arg6[%c0_46, %c1_47, %c0_48, %c0_49] : memref<1x3x8x16xf32, #tpu.memory_space<vmem>>, vector<1x1x8x16xf32>
    %42 = vector.shape_cast %41 : vector<1x1x8x16xf32> to vector<8x16xf32>
    %c0_50 = arith.constant 0 : index
    %c1_51 = arith.constant 1 : index
    %c0_52 = arith.constant 0 : index
    %c0_53 = arith.constant 0 : index
    %43 = vector.load %arg7[%c0_50, %c1_51, %c0_52, %c0_53] : memref<1x3x8x16xf32, #tpu.memory_space<vmem>>, vector<1x1x8x16xf32>
    %44 = vector.shape_cast %43 : vector<1x1x8x16xf32> to vector<8x16xf32>
    %45 = arith.subf %42, %44 : vector<8x16xf32>
    %46 = arith.addf %34, %45 : vector<8x16xf32>
    %c0_54 = arith.constant 0 : index
    %c2_55 = arith.constant 2 : index
    %c0_56 = arith.constant 0 : index
    %c0_57 = arith.constant 0 : index
    %47 = vector.load %arg4[%c0_54, %c2_55, %c0_56, %c0_57] : memref<1x3x8x16xf32, #tpu.memory_space<vmem>>, vector<1x1x8x16xf32>
    %48 = vector.shape_cast %47 : vector<1x1x8x16xf32> to vector<8x16xf32>
    %c0_58 = arith.constant 0 : index
    %c2_59 = arith.constant 2 : index
    %c0_60 = arith.constant 0 : index
    %c0_61 = arith.constant 0 : index
    %49 = vector.load %arg5[%c0_58, %c2_59, %c0_60, %c0_61] : memref<1x3x8x16xf32, #tpu.memory_space<vmem>>, vector<1x1x8x16xf32>
    %50 = vector.shape_cast %49 : vector<1x1x8x16xf32> to vector<8x16xf32>
    %51 = arith.subf %48, %50 : vector<8x16xf32>
    %52 = arith.addf %40, %51 : vector<8x16xf32>
    %c0_62 = arith.constant 0 : index
    %c2_63 = arith.constant 2 : index
    %c0_64 = arith.constant 0 : index
    %c0_65 = arith.constant 0 : index
    %53 = vector.load %arg6[%c0_62, %c2_63, %c0_64, %c0_65] : memref<1x3x8x16xf32, #tpu.memory_space<vmem>>, vector<1x1x8x16xf32>
    %54 = vector.shape_cast %53 : vector<1x1x8x16xf32> to vector<8x16xf32>
    %c0_66 = arith.constant 0 : index
    %c2_67 = arith.constant 2 : index
    %c0_68 = arith.constant 0 : index
    %c0_69 = arith.constant 0 : index
    %55 = vector.load %arg7[%c0_66, %c2_67, %c0_68, %c0_69] : memref<1x3x8x16xf32, #tpu.memory_space<vmem>>, vector<1x1x8x16xf32>
    %56 = vector.shape_cast %55 : vector<1x1x8x16xf32> to vector<8x16xf32>
    %57 = arith.subf %54, %56 : vector<8x16xf32>
    %58 = arith.addf %46, %57 : vector<8x16xf32>
    %59 = vector.extract_strided_slice %52 {offsets = [7, 0], sizes = [1, 16], strides = [1, 1]} : vector<8x16xf32> to vector<1x16xf32>
    %60 = vector.extract_strided_slice %58 {offsets = [0, 0], sizes = [1, 16], strides = [1, 1]} : vector<8x16xf32> to vector<1x16xf32>
    %c0_i32 = arith.constant 0 : i32
    %61 = arith.cmpi sgt, %0, %c0_i32 : i32
    %cst_70 = arith.constant 0.000000e+00 : f32
    %62 = vector.broadcast %cst_70 : f32 to vector<1x16xf32>
    %63 = arith.select %61, %59, %62 : vector<1x16xf32>
    %c16_i32_71 = arith.constant 16 : i32
    %64 = arith.addi %0, %c16_i32_71 : i32
    %c16_i32_72 = arith.constant 16 : i32
    %65 = arith.cmpi slt, %64, %c16_i32_72 : i32
    %cst_73 = arith.constant 0.000000e+00 : f32
    %66 = vector.broadcast %cst_73 : f32 to vector<1x16xf32>
    %67 = arith.select %65, %60, %66 : vector<1x16xf32>
    %68 = tpu.concatenate %63, %24, %67 in 0 : vector<1x16xf32>, vector<16x16xf32>, vector<1x16xf32> -> vector<18x16xf32>
    %cst_74 = arith.constant 0.000000e+00 : f32
    %69 = vector.broadcast %cst_74 : f32 to vector<18x112xf32>
    %70 = tpu.concatenate %68, %69 in 1 : vector<18x16xf32>, vector<18x112xf32> -> vector<18x128xf32>
    %c1_i32 = arith.constant 1 : i32
    %71 = tpu.dynamic_rotate %70 by %c1_i32 dim 1 : vector<18x128xf32>, i32 -> vector<18x128xf32>
    %72 = arith.addf %70, %71 : vector<18x128xf32>
    %c127_i32 = arith.constant 127 : i32
    %73 = tpu.dynamic_rotate %70 by %c127_i32 dim 1 : vector<18x128xf32>, i32 -> vector<18x128xf32>
    %74 = arith.addf %72, %73 : vector<18x128xf32>
    %75 = vector.extract_strided_slice %74 {offsets = [0, 0], sizes = [16, 128], strides = [1, 1]} : vector<18x128xf32> to vector<16x128xf32>
    %76 = vector.extract_strided_slice %74 {offsets = [1, 0], sizes = [16, 128], strides = [1, 1]} : vector<18x128xf32> to vector<16x128xf32>
    %77 = arith.addf %75, %76 : vector<16x128xf32>
    %78 = vector.extract_strided_slice %74 {offsets = [2, 0], sizes = [16, 128], strides = [1, 1]} : vector<18x128xf32> to vector<16x128xf32>
    %79 = arith.addf %77, %78 : vector<16x128xf32>
    %80 = vector.extract_strided_slice %70 {offsets = [1, 0], sizes = [16, 128], strides = [1, 1]} : vector<18x128xf32> to vector<16x128xf32>
    %cst_75 = arith.constant 9.000000e+00 : f32
    %81 = vector.broadcast %cst_75 : f32 to vector<16x128xf32>
    %82 = arith.mulf %81, %80 : vector<16x128xf32>
    %83 = arith.subf %82, %79 : vector<16x128xf32>
    %84 = tpu.iota {dimensions = array<i32: 0>} : vector<16x128xi32>
    %85 = vector.broadcast %0 : i32 to vector<16x128xi32>
    %86 = arith.addi %84, %85 : vector<16x128xi32>
    %87 = tpu.iota {dimensions = array<i32: 1>} : vector<16x128xi32>
    %c16_i32_76 = arith.constant 16 : i32
    %88 = vector.broadcast %c16_i32_76 : i32 to vector<16x128xi32>
    %89 = arith.cmpi slt, %86, %88 : vector<16x128xi32>
    %c16_i32_77 = arith.constant 16 : i32
    %90 = vector.broadcast %c16_i32_77 : i32 to vector<16x128xi32>
    %91 = arith.cmpi slt, %87, %90 : vector<16x128xi32>
    %92 = arith.andi %89, %91 : vector<16x128xi1>
    %93 = arith.mulf %83, %83 : vector<16x128xf32>
    %cst_78 = arith.constant 0.000000e+00 : f32
    %94 = vector.broadcast %cst_78 : f32 to vector<16x128xf32>
    %95 = arith.select %92, %93, %94 : vector<16x128xi1>, vector<16x128xf32>
    %96 = vector.shape_cast %95 : vector<16x128xf32> to vector<2x8x128xf32>
    %cst_79 = arith.constant dense<0.000000e+00> : vector<8x128xf32>
    %97 = vector.multi_reduction <add>, %96, %cst_79 [0] : vector<2x8x128xf32> to vector<8x128xf32>
    %98 = vector.shape_cast %97 : vector<8x128xf32> to vector<1x1x8x128xf32>
    %c0_80 = arith.constant 0 : index
    %c0_81 = arith.constant 0 : index
    %c0_82 = arith.constant 0 : index
    %c0_83 = arith.constant 0 : index
    %99 = vector.load %arg8[%c0_80, %c0_81, %c0_82, %c0_83] : memref<1x1x8x128xf32, #tpu.memory_space<vmem>>, vector<1x1x8x128xf32>
    tpu.vector_store %arg8[%c0_80, %c0_81, %c0_82, %c0_83], %98 {strides = array<i32>} : memref<1x1x8x128xf32, #tpu.memory_space<vmem>>, vector<1x1x8x128xf32>,
    return
  }
  func.func @transform_0(%arg0: i32, %arg1: i32) -> (i32, i32, i32, i32) {
    %c0_i32 = arith.constant 0 : i32
    %c0_i32_0 = arith.constant 0 : i32
    %c0_i32_1 = arith.constant 0 : i32
    return %arg0, %c0_i32, %arg1, %c0_i32_0 : i32, i32, i32, i32
  }
  func.func @transform_1(%arg0: i32, %arg1: i32) -> (i32, i32, i32, i32) {
    %c0_i32 = arith.constant 0 : i32
    %c0_i32_0 = arith.constant 0 : i32
    %c0_i32_1 = arith.constant 0 : i32
    return %arg0, %c0_i32, %arg1, %c0_i32_0 : i32, i32, i32, i32
  }
  func.func @transform_2(%arg0: i32, %arg1: i32) -> (i32, i32, i32, i32) {
    %c2_i32 = arith.constant 2 : i32
    %0 = arith.muli %arg1, %c2_i32 : i32
    %c1_i32 = arith.constant 1 : i32
    %1 = arith.subi %0, %c1_i32 : i32
    %c0_i32 = arith.constant 0 : i32
    %2 = arith.maxsi %1, %c0_i32 : i32
    %c0_i32_0 = arith.constant 0 : i32
    %c0_i32_1 = arith.constant 0 : i32
    %c0_i32_2 = arith.constant 0 : i32
    return %arg0, %c0_i32_0, %2, %c0_i32_1 : i32, i32, i32, i32
  }
  func.func @transform_3(%arg0: i32, %arg1: i32) -> (i32, i32, i32, i32) {
    %c2_i32 = arith.constant 2 : i32
    %0 = arith.muli %arg1, %c2_i32 : i32
    %c1_i32 = arith.constant 1 : i32
    %1 = arith.subi %0, %c1_i32 : i32
    %c0_i32 = arith.constant 0 : i32
    %2 = arith.maxsi %1, %c0_i32 : i32
    %c0_i32_0 = arith.constant 0 : i32
    %c0_i32_1 = arith.constant 0 : i32
    %c0_i32_2 = arith.constant 0 : i32
    return %arg0, %c0_i32_0, %2, %c0_i32_1 : i32, i32, i32, i32
  }
  func.func @transform_4(%arg0: i32, %arg1: i32) -> (i32, i32, i32, i32) {
    %c1_i32 = arith.constant 1 : i32
    %0 = arith.addi %arg1, %c1_i32 : i32
    %c2_i32 = arith.constant 2 : i32
    %1 = arith.muli %0, %c2_i32 : i32
    %c1_i32_0 = arith.constant 1 : i32
    %2 = arith.minsi %1, %c1_i32_0 : i32
    %c0_i32 = arith.constant 0 : i32
    %c0_i32_1 = arith.constant 0 : i32
    %c0_i32_2 = arith.constant 0 : i32
    return %arg0, %c0_i32, %2, %c0_i32_1 : i32, i32, i32, i32
  }
  func.func @transform_5(%arg0: i32, %arg1: i32) -> (i32, i32, i32, i32) {
    %c1_i32 = arith.constant 1 : i32
    %0 = arith.addi %arg1, %c1_i32 : i32
    %c2_i32 = arith.constant 2 : i32
    %1 = arith.muli %0, %c2_i32 : i32
    %c1_i32_0 = arith.constant 1 : i32
    %2 = arith.minsi %1, %c1_i32_0 : i32
    %c0_i32 = arith.constant 0 : i32
    %c0_i32_1 = arith.constant 0 : i32
    %c0_i32_2 = arith.constant 0 : i32
    return %arg0, %c0_i32, %2, %c0_i32_1 : i32, i32, i32, i32
  }
  func.func @transform_6(%arg0: i32, %arg1: i32) -> (i32, i32, i32, i32) {
    %c0_i32 = arith.constant 0 : i32
    %c0_i32_0 = arith.constant 0 : i32
    %c0_i32_1 = arith.constant 0 : i32
    return %arg0, %arg1, %c0_i32, %c0_i32_0 : i32, i32, i32, i32
  }
}

</mosaic_0001>

<llo_original>
// kernel: tpu_custom_call.1
$region0: #{tpu_custom_call.1}
  #allocation0 [shape = 'u32[]', space=smem, size = 0x4, offset = 0x4, fixed_abs, tag = 'smem constant byte address 0x4 - core index']
  #allocation1 [shape = 'u32[72,128]{1,0:T(1,128)}', space=vmem, size = 0x9000, scoped, tag = 'internal scratch']
  %s0 = inlined_call_operand.hbm [shape: f32[2,3,16,16], index: 0, kind: input, shape index: {}]
  %s1 = inlined_call_operand.hbm [shape: f32[2,3,16,16], index: 1, kind: input, shape index: {}]
  %s2 = inlined_call_operand.hbm [shape: f32[2,3,16,16], index: 2, kind: input, shape index: {}]
  %s3 = inlined_call_operand.hbm [shape: f32[2,3,16,16], index: 3, kind: input, shape index: {}]
  %s4 = inlined_call_operand.hbm [shape: f32[2,3,16,16], index: 4, kind: input, shape index: {}]
  %s5 = inlined_call_operand.hbm [shape: f32[2,3,16,16], index: 5, kind: input, shape index: {}]
  %s6 = inlined_call_operand.hbm [shape: f32[2,1,8,128], index: 6, kind: output, shape index: {}]
  %s7 = sld [smem:[#allocation0]]
  $region81: #{tpu_custom_call.1} parent=0
    _
  %s9 = ssub.s32 1, %s7
  %s10 = scalar_select 0, %s9, %s7
  $region1: #{tpu_custom_call.1} parent=0
    #allocation2 [shape = 'u8[49152]{0}', space=vmem, size = 0xc000, scoped, tag = 'input window, operand 0']
    #allocation3 [shape = 's32[2]{0}', space=sflag, size = 0x8, scoped, tag = 'scoped memory for tpu_custom_call.1']
    #allocation4 [shape = 's32[2]{0}', space=sflag, size = 0x8, scoped, tag = 'scoped memory for tpu_custom_call.1']
    #allocation5 [shape = 'u8[49152]{0}', space=vmem, size = 0xc000, scoped, tag = 'input window, operand 1']
    #allocation6 [shape = 's32[2]{0}', space=sflag, size = 0x8, scoped, tag = 'scoped memory for tpu_custom_call.1']
    #allocation7 [shape = 'u8[24576]{0}', space=vmem, size = 0x6000, scoped, tag = 'input window, operand 2']
    #allocation8 [shape = 'u8[24576]{0}', space=vmem, size = 0x6000, scoped, tag = 'input window, operand 3']
    #allocation9 [shape = 's32[2]{0}', space=sflag, size = 0x8, scoped, tag = 'scoped memory for tpu_custom_call.1']
    #allocation10 [shape = 'u8[24576]{0}', space=vmem, size = 0x6000, scoped, tag = 'input window, operand 4']
    #allocation11 [shape = 'u8[24576]{0}', space=vmem, size = 0x6000, scoped, tag = 'input window, operand 5']
    #allocation12 [shape = 's32[2]{0}', space=sflag, size = 0x8, scoped, tag = 'scoped memory for tpu_custom_call.1']
    #allocation13 [shape = 'u8[8192]{0}', space=vmem, size = 0x2000, scoped, tag = 'output window, operand 0']
    %11 = vsyncpa [#allocation3], 0
    %s12 = scalar_lea.sflag [#allocation3], 1
    %13 = vsyncpa %s12, 0
    %14 = vsyncpa [#allocation6], 0
    %s15 = scalar_lea.sflag [#allocation6], 1
    %16 = vsyncpa %s15, 0
    %17 = vsyncpa [#allocation9], 0
    %s18 = scalar_lea.sflag [#allocation9], 1
    %19 = vsyncpa %s18, 0
    %20 = vsyncpa [#allocation12], 0
    %s21 = scalar_lea.sflag [#allocation12], 1
    %22 = vsyncpa %s21, 0
    %23 = vsyncpa [#allocation4], 0
    %s24 = scalar_lea.sflag [#allocation4], 1
    %25 = vsyncpa %s24, 0
    loop: start=0, step=1, limit=4
    $region2: #{tpu_custom_call.1} parent=1 // loop_pre_header
      _
    $region3: #{tpu_custom_call.1} parent=1 // loop_header
      %s27 = sphi 0, %s31
      %p28 = scmp.ge.s32.totalorder %s27, 4
      %s34 = sphi 0, %s46
      %s35 = sphi 0, %s42
      %s36 = sphi 0, %s34
      %s37 = sphi 0, %s35
      %s38 = sphi 0, %s36
      %s39 = sphi 0, %s37
      %s51 = sphi 0, %s53
      %s54 = sphi 0, %s51
      %s55 = sphi 0, %s54
      %s71 = sphi 0, %s55
      %s79 = sphi 0, %s81
      %s82 = sphi 0, %s79
      %s83 = sphi 0, %s82
      %s99 = sphi 0, %s83
      %s115 = sphi 0, %s117
      %s118 = sphi 0, %s115
      %s119 = sphi 0, %s118
      %s135 = sphi 0, %s119
      %s151 = sphi 0, %s153
      %s154 = sphi 0, %s151
      %s155 = sphi 0, %s154
      %s171 = sphi 0, %s155
      %s187 = sphi 0, %s189
      %s190 = sphi 0, %s187
      %s191 = sphi 0, %s190
      %s207 = sphi 0, %s191
      %s223 = sphi 0, %s225
      %s226 = sphi 0, %s223
      %s227 = sphi 0, %s226
      %s243 = sphi 0, %s227
      %s251 = sphi 0, %s253
      %s254 = sphi 0, %s251
      %s255 = sphi 0, %s254
      %s271 = sphi 0, %s255
    $region4: #{tpu_custom_call.1} parent=1 // loop_header_branch
      %30 = sbr.rel (%p28) target = $region8
    $region5: #{tpu_custom_call.1} parent=1 // loop_body
      %s32 = ssub.s32 %s27, 1
      %s33 = ssub.s32 %s27, 2
      %s40 = sadd.s32 1, %s35
      %p41 = scmp.ge.s32.totalorder %s40, 1
      %s42 = scalar_select %p41, 0, %s40
      %s43 = sadd.s32 1, %s34
      %s44 = scalar_select %p41, %s43, %s34
      %p45 = scmp.ge.s32.totalorder %s44, 2
      %s46 = scalar_select %p45, 0, %s44
      %s47 = ssub.s32 %s34, %s46
      %s48 = ssub.s32 %s35, %s42
      %s49 = sor.u32 %s47, %s48
      %p50 = scmp.eq.s32.totalorder %s49, 0
      %s52 = sadd.s32 %s51, 1
      %s53 = scalar_select %p50, %s51, %s52
      %p56 = pneg %p50
      %p57 = scmp.eq.s32.totalorder %s27, 1
      %p58 = por %p56, %p57
      %p59 = scmp.ne.s32.totalorder %s51, %s54
      %p60 = scmp.eq.s32.totalorder %s27, 0
      %p61 = por %p59, %p60
      %p62 = scmp.ne.s32.totalorder %s51, %s54
      %p63 = scmp.eq.s32.totalorder %s32, 1
      %p64 = por %p62, %p63
      %p65 = scmp.ne.s32.totalorder %s54, %s55
      %p66 = scmp.eq.s32.totalorder %s32, 0
      %p67 = por %p65, %p66
      %p68 = scmp.ne.s32.totalorder %s54, %s55
      %p69 = scmp.eq.s32.totalorder %s33, 1
      %p70 = por %p68, %p69
      %p72 = scmp.ne.s32.totalorder %s55, %s71
      %p73 = scmp.eq.s32.totalorder %s33, 0
      %p74 = por %p72, %p73
      %s75 = ssub.s32 %s34, %s46
      %s76 = ssub.s32 %s35, %s42
      %s77 = sor.u32 %s75, %s76
      %p78 = scmp.eq.s32.totalorder %s77, 0
      %s80 = sadd.s32 %s79, 1
      %s81 = scalar_select %p78, %s79, %s80
      %p84 = pneg %p78
      %p85 = scmp.eq.s32.totalorder %s27, 1
      %p86 = por %p84, %p85
      %p87 = scmp.ne.s32.totalorder %s79, %s82
      %p88 = scmp.eq.s32.totalorder %s27, 0
      %p89 = por %p87, %p88
      %p90 = scmp.ne.s32.totalorder %s79, %s82
      %p91 = scmp.eq.s32.totalorder %s32, 1
      %p92 = por %p90, %p91
      %p93 = scmp.ne.s32.totalorder %s82, %s83
      %p94 = scmp.eq.s32.totalorder %s32, 0
      %p95 = por %p93, %p94
      %p96 = scmp.ne.s32.totalorder %s82, %s83
      %p97 = scmp.eq.s32.totalorder %s33, 1
      %p98 = por %p96, %p97
      %p100 = scmp.ne.s32.totalorder %s83, %s99
      %p101 = scmp.eq.s32.totalorder %s33, 0
      %p102 = por %p100, %p101
      %s103 = smul.u32 %s35, 2
      %s104 = ssub.s32 %s103, 1
      %p105 = scmp.gt.s32.totalorder %s104, 0
      %s106 = scalar_select %p105, %s104, 0
      %s107 = smul.u32 %s42, 2
      %s108 = ssub.s32 %s107, 1
      %p109 = scmp.gt.s32.totalorder %s108, 0
      %s110 = scalar_select %p109, %s108, 0
      %s111 = ssub.s32 %s34, %s46
      %s112 = ssub.s32 %s106, %s110
      %s113 = sor.u32 %s111, %s112
      %p114 = scmp.eq.s32.totalorder %s113, 0
      %s116 = sadd.s32 %s115, 1
      %s117 = scalar_select %p114, %s115, %s116
      %p120 = pneg %p114
      %p121 = scmp.eq.s32.totalorder %s27, 1
      %p122 = por %p120, %p121
      %p123 = scmp.ne.s32.totalorder %s115, %s118
      %p124 = scmp.eq.s32.totalorder %s27, 0
      %p125 = por %p123, %p124
      %p126 = scmp.ne.s32.totalorder %s115, %s118
      %p127 = scmp.eq.s32.totalorder %s32, 1
      %p128 = por %p126, %p127
      %p129 = scmp.ne.s32.totalorder %s118, %s119
      %p130 = scmp.eq.s32.totalorder %s32, 0
      %p131 = por %p129, %p130
      %p132 = scmp.ne.s32.totalorder %s118, %s119
      %p133 = scmp.eq.s32.totalorder %s33, 1
      %p134 = por %p132, %p133
      %p136 = scmp.ne.s32.totalorder %s119, %s135
      %p137 = scmp.eq.s32.totalorder %s33, 0
      %p138 = por %p136, %p137
      %s139 = smul.u32 %s35, 2
      %s140 = ssub.s32 %s139, 1
      %p141 = scmp.gt.s32.totalorder %s140, 0
      %s142 = scalar_select %p141, %s140, 0
      %s143 = smul.u32 %s42, 2
      %s144 = ssub.s32 %s143, 1
      %p145 = scmp.gt.s32.totalorder %s144, 0
      %s146 = scalar_select %p145, %s144, 0
      %s147 = ssub.s32 %s34, %s46
      %s148 = ssub.s32 %s142, %s146
      %s149 = sor.u32 %s147, %s148
      %p150 = scmp.eq.s32.totalorder %s149, 0
      %s152 = sadd.s32 %s151, 1
      %s153 = scalar_select %p150, %s151, %s152
      %p156 = pneg %p150
      %p157 = scmp.eq.s32.totalorder %s27, 1
      %p158 = por %p156, %p157
      %p159 = scmp.ne.s32.totalorder %s151, %s154
      %p160 = scmp.eq.s32.totalorder %s27, 0
      %p161 = por %p159, %p160
      %p162 = scmp.ne.s32.totalorder %s151, %s154
      %p163 = scmp.eq.s32.totalorder %s32, 1
      %p164 = por %p162, %p163
      %p165 = scmp.ne.s32.totalorder %s154, %s155
      %p166 = scmp.eq.s32.totalorder %s32, 0
      %p167 = por %p165, %p166
      %p168 = scmp.ne.s32.totalorder %s154, %s155
      %p169 = scmp.eq.s32.totalorder %s33, 1
      %p170 = por %p168, %p169
      %p172 = scmp.ne.s32.totalorder %s155, %s171
      %p173 = scmp.eq.s32.totalorder %s33, 0
      %p174 = por %p172, %p173
      %s175 = sadd.s32 %s35, 1
      %s176 = smul.u32 %s175, 2
      %p177 = scmp.lt.s32.totalorder %s176, 1
      %s178 = scalar_select %p177, %s176, 1
      %s179 = sadd.s32 %s42, 1
      %s180 = smul.u32 %s179, 2
      %p181 = scmp.lt.s32.totalorder %s180, 1
      %s182 = scalar_select %p181, %s180, 1
      %s183 = ssub.s32 %s34, %s46
      %s184 = ssub.s32 %s178, %s182
      %s185 = sor.u32 %s183, %s184
      %p186 = scmp.eq.s32.totalorder %s185, 0
      %s188 = sadd.s32 %s187, 1
      %s189 = scalar_select %p186, %s187, %s188
      %p192 = pneg %p186
      %p193 = scmp.eq.s32.totalorder %s27, 1
      %p194 = por %p192, %p193
      %p195 = scmp.ne.s32.totalorder %s187, %s190
      %p196 = scmp.eq.s32.totalorder %s27, 0
      %p197 = por %p195, %p196
      %p198 = scmp.ne.s32.totalorder %s187, %s190
      %p199 = scmp.eq.s32.totalorder %s32, 1
      %p200 = por %p198, %p199
      %p201 = scmp.ne.s32.totalorder %s190, %s191
      %p202 = scmp.eq.s32.totalorder %s32, 0
      %p203 = por %p201, %p202
      %p204 = scmp.ne.s32.totalorder %s190, %s191
      %p205 = scmp.eq.s32.totalorder %s33, 1
      %p206 = por %p204, %p205
      %p208 = scmp.ne.s32.totalorder %s191, %s207
      %p209 = scmp.eq.s32.totalorder %s33, 0
      %p210 = por %p208, %p209
      %s211 = sadd.s32 %s35, 1
      %s212 = smul.u32 %s211, 2
      %p213 = scmp.lt.s32.totalorder %s212, 1
      %s214 = scalar_select %p213, %s212, 1
      %s215 = sadd.s32 %s42, 1
      %s216 = smul.u32 %s215, 2
      %p217 = scmp.lt.s32.totalorder %s216, 1
      %s218 = scalar_select %p217, %s216, 1
      %s219 = ssub.s32 %s34, %s46
      %s220 = ssub.s32 %s214, %s218
      %s221 = sor.u32 %s219, %s220
      %p222 = scmp.eq.s32.totalorder %s221, 0
      %s224 = sadd.s32 %s223, 1
      %s225 = scalar_select %p222, %s223, %s224
      %p228 = pneg %p222
      %p229 = scmp.eq.s32.totalorder %s27, 1
      %p230 = por %p228, %p229
      %p231 = scmp.ne.s32.totalorder %s223, %s226
      %p232 = scmp.eq.s32.totalorder %s27, 0
      %p233 = por %p231, %p232
      %p234 = scmp.ne.s32.totalorder %s223, %s226
      %p235 = scmp.eq.s32.totalorder %s32, 1
      %p236 = por %p234, %p235
      %p237 = scmp.ne.s32.totalorder %s226, %s227
      %p238 = scmp.eq.s32.totalorder %s32, 0
      %p239 = por %p237, %p238
      %p240 = scmp.ne.s32.totalorder %s226, %s227
      %p241 = scmp.eq.s32.totalorder %s33, 1
      %p242 = por %p240, %p241
      %p244 = scmp.ne.s32.totalorder %s227, %s243
      %p245 = scmp.eq.s32.totalorder %s33, 0
      %p246 = por %p244, %p245
      %s247 = ssub.s32 %s34, %s46
      %s248 = ssub.s32 %s35, %s42
      %s249 = sor.u32 %s247, %s248
      %p250 = scmp.eq.s32.totalorder %s249, 0
      %s252 = sadd.s32 %s251, 1
      %s253 = scalar_select %p250, %s251, %s252
      %p256 = pneg %p250
      %p257 = scmp.eq.s32.totalorder %s27, 1
      %p258 = por %p256, %p257
      %p259 = scmp.ne.s32.totalorder %s251, %s254
      %p260 = scmp.eq.s32.totalorder %s27, 0
      %p261 = por %p259, %p260
      %p262 = scmp.ne.s32.totalorder %s251, %s254
      %p263 = scmp.eq.s32.totalorder %s32, 1
      %p264 = por %p262, %p263
      %p265 = scmp.ne.s32.totalorder %s254, %s255
      %p266 = scmp.eq.s32.totalorder %s32, 0
      %p267 = por %p265, %p266
      %p268 = scmp.ne.s32.totalorder %s254, %s255
      %p269 = scmp.eq.s32.totalorder %s33, 1
      %p270 = por %p268, %p269
      %p272 = scmp.ne.s32.totalorder %s255, %s271
      %p273 = scmp.eq.s32.totalorder %s33, 0
      %p274 = por %p272, %p273
      %p275 = scmp.le.s32.totalorder 1, %s27
      %p276 = scmp.lt.s32.totalorder %s27, 3
      %p277 = pnand %p275, %p276
      %p278 = pneg %p277
      // Predicated region
      $region9: #{tpu_custom_call.1} parent=5 // pred_check
        _
      $region10: #{tpu_custom_call.1} parent=5 // pred_check_branch
        %280 = sbr.rel (%p277) target = $region12
      $region11: #{tpu_custom_call.1} parent=5 // pred_region
        %s281 = ssub.s32 %s27, 1
      $region12: #{tpu_custom_call.1} parent=5 // pred_fallthru
        _
      %p282 = scmp.lt.s32.totalorder %s27, 2
      // Predicated region
      $region13: #{tpu_custom_call.1} parent=5 // pred_check
        %p283 = pneg %p282
      $region14: #{tpu_custom_call.1} parent=5 // pred_check_branch
        %285 = sbr.rel (%p283) target = $region16
      $region15: #{tpu_custom_call.1} parent=5 // pred_region
        // Predicated region
        $region17: #{tpu_custom_call.1} parent=15 // pred_check
          %p286 = pneg %p61
        $region18: #{tpu_custom_call.1} parent=15 // pred_check_branch
          %288 = sbr.rel (%p286) target = $region20
        $region19: #{tpu_custom_call.1} parent=15 // pred_region
          %s289 = sand.u32 %s51, 1
          %s290 = scalar_lea.sflag [#allocation3], %s289
          %s291 = sand.u32 %s51, 1
          %s292 = smul.addr %s291, 48
          %s293 = scalar_lea.vmem [#allocation2], %s292
          %s294 = smul.u32 2, %s35
          %296 = vsyncadd %s290, 0
          %s297 = smul.addr %s34, 6
          %s298 = sadd.s32 %s294, %s297
          %s299 = smul.addr %s298, 8
          %s300 = scalar_lea.hbm %s0, %s299
          %s301 = sshll.u32 %s300, 4
          %s302 = int_to_ptr.hbm [resolvable:$true] %s301
          %s303 = sshll.u32 %s293, 4
          %s304 = int_to_ptr.vmem [resolvable:$true] %s303
          %309 = dma.hbm_to_vmem [thread:$0]  %s302, 768, %s304, %s290, 128, 128, 8
        $region20: #{tpu_custom_call.1} parent=15 // pred_fallthru
          _
        // Predicated region
        $region21: #{tpu_custom_call.1} parent=15 // pred_check
          %p310 = pneg %p89
        $region22: #{tpu_custom_call.1} parent=15 // pred_check_branch
          %312 = sbr.rel (%p310) target = $region24
        $region23: #{tpu_custom_call.1} parent=15 // pred_region
          %s313 = sand.u32 %s27, 1
          %s314 = scalar_lea.sflag [#allocation6], %s313
          %s315 = sand.u32 %s79, 1
          %s316 = smul.addr %s315, 48
          %s317 = scalar_lea.vmem [#allocation5], %s316
          %s318 = smul.u32 2, %s35
          %320 = vsyncadd %s314, 0
          %s321 = smul.addr %s34, 6
          %s322 = sadd.s32 %s318, %s321
          %s323 = smul.addr %s322, 8
          %s324 = scalar_lea.hbm %s1, %s323
          %s325 = sshll.u32 %s324, 4
          %s326 = int_to_ptr.hbm [resolvable:$true] %s325
          %s327 = sshll.u32 %s317, 4
          %s328 = int_to_ptr.vmem [resolvable:$true] %s327
          %333 = dma.hbm_to_vmem [thread:$0]  %s326, 768, %s328, %s314, 128, 128, 8
        $region24: #{tpu_custom_call.1} parent=15 // pred_fallthru
          _
        // Predicated region
        $region25: #{tpu_custom_call.1} parent=15 // pred_check
          %p334 = pneg %p125
        $region26: #{tpu_custom_call.1} parent=15 // pred_check_branch
          %336 = sbr.rel (%p334) target = $region28
        $region27: #{tpu_custom_call.1} parent=15 // pred_region
          %s337 = sand.u32 %s27, 1
          %s338 = scalar_lea.sflag [#allocation6], %s337
          %s339 = sand.u32 %s115, 1
          %s340 = smul.addr %s339, 24
          %s341 = scalar_lea.vmem [#allocation7], %s340
          %s342 = smul.u32 %s35, 2
          %s343 = ssub.s32 %s342, 1
          %p344 = scmp.gt.s32.totalorder %s343, 0
          %s345 = scalar_select %p344, %s343, 0
          %347 = vsyncadd %s338, 0
          %s348 = smul.addr %s34, 6
          %s349 = sadd.s32 %s345, %s348
          %s350 = smul.addr %s349, 8
          %s351 = scalar_lea.hbm %s2, %s350
          %s352 = sshll.u32 %s351, 4
          %s353 = int_to_ptr.hbm [resolvable:$true] %s352
          %s354 = sshll.u32 %s341, 4
          %s355 = int_to_ptr.vmem [resolvable:$true] %s354
          %360 = dma.hbm_to_vmem [thread:$0]  %s353, 384, %s355, %s338, 256, 128, 8
        $region28: #{tpu_custom_call.1} parent=15 // pred_fallthru
          _
        // Predicated region
        $region29: #{tpu_custom_call.1} parent=15 // pred_check
          %p361 = pneg %p161
        $region30: #{tpu_custom_call.1} parent=15 // pred_check_branch
          %363 = sbr.rel (%p361) target = $region32
        $region31: #{tpu_custom_call.1} parent=15 // pred_region
          %s364 = sand.u32 %s27, 1
          %s365 = scalar_lea.sflag [#allocation9], %s364
          %s366 = sand.u32 %s151, 1
          %s367 = smul.addr %s366, 24
          %s368 = scalar_lea.vmem [#allocation8], %s367
          %s369 = smul.u32 %s35, 2
          %s370 = ssub.s32 %s369, 1
          %p371 = scmp.gt.s32.totalorder %s370, 0
          %s372 = scalar_select %p371, %s370, 0
          %374 = vsyncadd %s365, 0
          %s375 = smul.addr %s34, 6
          %s376 = sadd.s32 %s372, %s375
          %s377 = smul.addr %s376, 8
          %s378 = scalar_lea.hbm %s3, %s377
          %s379 = sshll.u32 %s378, 4
          %s380 = int_to_ptr.hbm [resolvable:$true] %s379
          %s381 = sshll.u32 %s368, 4
          %s382 = int_to_ptr.vmem [resolvable:$true] %s381
          %387 = dma.hbm_to_vmem [thread:$0]  %s380, 384, %s382, %s365, 256, 128, 8
        $region32: #{tpu_custom_call.1} parent=15 // pred_fallthru
          _
        // Predicated region
        $region33: #{tpu_custom_call.1} parent=15 // pred_check
          %p388 = pneg %p197
        $region34: #{tpu_custom_call.1} parent=15 // pred_check_branch
          %390 = sbr.rel (%p388) target = $region36
        $region35: #{tpu_custom_call.1} parent=15 // pred_region
          %s391 = sand.u32 %s27, 1
          %s392 = scalar_lea.sflag [#allocation9], %s391
          %s393 = sand.u32 %s187, 1
          %s394 = smul.addr %s393, 24
          %s395 = scalar_lea.vmem [#allocation10], %s394
          %s396 = sadd.s32 %s35, 1
          %s397 = smul.u32 %s396, 2
          %p398 = scmp.lt.s32.totalorder %s397, 1
          %s399 = scalar_select %p398, %s397, 1
          %401 = vsyncadd %s392, 0
          %s402 = smul.addr %s34, 6
          %s403 = sadd.s32 %s399, %s402
          %s404 = smul.addr %s403, 8
          %s405 = scalar_lea.hbm %s4, %s404
          %s406 = sshll.u32 %s405, 4
          %s407 = int_to_ptr.hbm [resolvable:$true] %s406
          %s408 = sshll.u32 %s395, 4
          %s409 = int_to_ptr.vmem [resolvable:$true] %s408
          %414 = dma.hbm_to_vmem [thread:$0]  %s407, 384, %s409, %s392, 256, 128, 8
        $region36: #{tpu_custom_call.1} parent=15 // pred_fallthru
          _
        // Predicated region
        $region37: #{tpu_custom_call.1} parent=15 // pred_check
          %p415 = pneg %p233
        $region38: #{tpu_custom_call.1} parent=15 // pred_check_branch
          %417 = sbr.rel (%p415) target = $region40
        $region39: #{tpu_custom_call.1} parent=15 // pred_region
          %s418 = sand.u32 %s223, 1
          %s419 = scalar_lea.sflag [#allocation12], %s418
          %s420 = sand.u32 %s223, 1
          %s421 = smul.addr %s420, 24
          %s422 = scalar_lea.vmem [#allocation11], %s421
          %s423 = sadd.s32 %s35, 1
          %s424 = smul.u32 %s423, 2
          %p425 = scmp.lt.s32.totalorder %s424, 1
          %s426 = scalar_select %p425, %s424, 1
          %428 = vsyncadd %s419, 0
          %s429 = smul.addr %s34, 6
          %s430 = sadd.s32 %s426, %s429
          %s431 = smul.addr %s430, 8
          %s432 = scalar_lea.hbm %s5, %s431
          %s433 = sshll.u32 %s432, 4
          %s434 = int_to_ptr.hbm [resolvable:$true] %s433
          %s435 = sshll.u32 %s422, 4
          %s436 = int_to_ptr.vmem [resolvable:$true] %s435
          %441 = dma.hbm_to_vmem [thread:$0]  %s434, 384, %s436, %s419, 256, 128, 8
        $region40: #{tpu_custom_call.1} parent=15 // pred_fallthru
          _
      $region16: #{tpu_custom_call.1} parent=5 // pred_fallthru
        _
      %p442 = scmp.le.s32.totalorder 1, %s27
      %p443 = scmp.lt.s32.totalorder %s27, 3
      %p444 = pnand %p442, %p443
      %p445 = pneg %p444
      // Predicated region
      $region41: #{tpu_custom_call.1} parent=5 // pred_check
        _
      $region42: #{tpu_custom_call.1} parent=5 // pred_check_branch
        %447 = sbr.rel (%p444) target = $region44
      $region43: #{tpu_custom_call.1} parent=5 // pred_region
        %s448 = ssub.s32 %s27, 1
        %s449 = sand.u32 %s54, 1
        %s450 = scalar_lea.sflag [#allocation3], %s449
        %s451 = sand.u32 %s54, 1
        %s452 = smul.addr %s451, 48
        %s453 = scalar_lea.vmem [#allocation2], %s452
        // Predicated region
        $region45: #{tpu_custom_call.1} parent=43 // pred_check
          %p454 = pneg %p67
        $region46: #{tpu_custom_call.1} parent=43 // pred_check_branch
          %456 = sbr.rel (%p454) target = $region48
        $region47: #{tpu_custom_call.1} parent=43 // pred_region
          %458 = dma.done %s450, 768
        $region48: #{tpu_custom_call.1} parent=43 // pred_fallthru
          _
        %s459 = sand.u32 %s32, 1
        %s460 = scalar_lea.sflag [#allocation6], %s459
        %s461 = sand.u32 %s82, 1
        %s462 = smul.addr %s461, 48
        %s463 = scalar_lea.vmem [#allocation5], %s462
        // Predicated region
        $region49: #{tpu_custom_call.1} parent=43 // pred_check
          %p464 = pneg %p95
        $region50: #{tpu_custom_call.1} parent=43 // pred_check_branch
          %466 = sbr.rel (%p464) target = $region52
        $region51: #{tpu_custom_call.1} parent=43 // pred_region
          %468 = dma.done %s460, 768
        $region52: #{tpu_custom_call.1} parent=43 // pred_fallthru
          _
        %s469 = sand.u32 %s32, 1
        %s470 = scalar_lea.sflag [#allocation6], %s469
        %s471 = sand.u32 %s118, 1
        %s472 = smul.addr %s471, 24
        %s473 = scalar_lea.vmem [#allocation7], %s472
        // Predicated region
        $region53: #{tpu_custom_call.1} parent=43 // pred_check
          %p474 = pneg %p131
        $region54: #{tpu_custom_call.1} parent=43 // pred_check_branch
          %476 = sbr.rel (%p474) target = $region56
        $region55: #{tpu_custom_call.1} parent=43 // pred_region
          %478 = dma.done %s470, 384
        $region56: #{tpu_custom_call.1} parent=43 // pred_fallthru
          _
        %s479 = sand.u32 %s32, 1
        %s480 = scalar_lea.sflag [#allocation9], %s479
        %s481 = sand.u32 %s154, 1
        %s482 = smul.addr %s481, 24
        %s483 = scalar_lea.vmem [#allocation8], %s482
        // Predicated region
        $region57: #{tpu_custom_call.1} parent=43 // pred_check
          %p484 = pneg %p167
        $region58: #{tpu_custom_call.1} parent=43 // pred_check_branch
          %486 = sbr.rel (%p484) target = $region60
        $region59: #{tpu_custom_call.1} parent=43 // pred_region
          %488 = dma.done %s480, 384
        $region60: #{tpu_custom_call.1} parent=43 // pred_fallthru
          _
        %s489 = sand.u32 %s32, 1
        %s490 = scalar_lea.sflag [#allocation9], %s489
        %s491 = sand.u32 %s190, 1
        %s492 = smul.addr %s491, 24
        %s493 = scalar_lea.vmem [#allocation10], %s492
        // Predicated region
        $region61: #{tpu_custom_call.1} parent=43 // pred_check
          %p494 = pneg %p203
        $region62: #{tpu_custom_call.1} parent=43 // pred_check_branch
          %496 = sbr.rel (%p494) target = $region64
        $region63: #{tpu_custom_call.1} parent=43 // pred_region
          %498 = dma.done %s490, 384
        $region64: #{tpu_custom_call.1} parent=43 // pred_fallthru
          _
        %s499 = sand.u32 %s226, 1
        %s500 = scalar_lea.sflag [#allocation12], %s499
        %s501 = sand.u32 %s226, 1
        %s502 = smul.addr %s501, 24
        %s503 = scalar_lea.vmem [#allocation11], %s502
        // Predicated region
        $region65: #{tpu_custom_call.1} parent=43 // pred_check
          %p504 = pneg %p239
        $region66: #{tpu_custom_call.1} parent=43 // pred_check_branch
          %506 = sbr.rel (%p504) target = $region68
        $region67: #{tpu_custom_call.1} parent=43 // pred_region
          %508 = dma.done %s500, 384
        $region68: #{tpu_custom_call.1} parent=43 // pred_fallthru
          _
        %s509 = sand.u32 %s54, 1
        %s510 = scalar_lea.sflag [#allocation3], %s509
        %s511 = sand.u32 %s54, 1
        %s512 = smul.addr %s511, 48
        %s513 = scalar_lea.vmem [#allocation2], %s512
        %p514 = pneg %p67
        %p515 = pneg %p64
        %s516 = sand.u32 %s32, 1
        %s517 = scalar_lea.sflag [#allocation6], %s516
        %s518 = sand.u32 %s82, 1
        %s519 = smul.addr %s518, 48
        %s520 = scalar_lea.vmem [#allocation5], %s519
        %p521 = pneg %p95
        %p522 = pneg %p92
        %s523 = sand.u32 %s32, 1
        %s524 = scalar_lea.sflag [#allocation6], %s523
        %s525 = sand.u32 %s118, 1
        %s526 = smul.addr %s525, 24
        %s527 = scalar_lea.vmem [#allocation7], %s526
        %p528 = pneg %p131
        %p529 = pneg %p128
        %s530 = sand.u32 %s32, 1
        %s531 = scalar_lea.sflag [#allocation9], %s530
        %s532 = sand.u32 %s154, 1
        %s533 = smul.addr %s532, 24
        %s534 = scalar_lea.vmem [#allocation8], %s533
        %p535 = pneg %p167
        %p536 = pneg %p164
        %s537 = sand.u32 %s32, 1
        %s538 = scalar_lea.sflag [#allocation9], %s537
        %s539 = sand.u32 %s190, 1
        %s540 = smul.addr %s539, 24
        %s541 = scalar_lea.vmem [#allocation10], %s540
        %p542 = pneg %p203
        %p543 = pneg %p200
        %s544 = sand.u32 %s226, 1
        %s545 = scalar_lea.sflag [#allocation12], %s544
        %s546 = sand.u32 %s226, 1
        %s547 = smul.addr %s546, 24
        %s548 = scalar_lea.vmem [#allocation11], %s547
        %p549 = pneg %p239
        %p550 = pneg %p236
        %p551 = pneg %p267
        %p552 = pneg %p264
        %s553 = sand.u32 %s254, 1
        %s554 = scalar_lea.sflag [#allocation4], %s553
        %s555 = sand.u32 %s254, 1
        %s556 = smul.addr %s555, 8
        %s557 = scalar_lea.vmem [#allocation13], %s556
        %s558 = smul.u32 2, %s37
        %s559 = smul.u32 2, %s37
        %s560 = smul.u32 %s37, 2
        %s561 = ssub.s32 %s560, 1
        %p562 = scmp.gt.s32.totalorder %s561, 0
        %s563 = scalar_select %p562, %s561, 0
        %s564 = smul.u32 %s37, 2
        %s565 = ssub.s32 %s564, 1
        %p566 = scmp.gt.s32.totalorder %s565, 0
        %s567 = scalar_select %p566, %s565, 0
        %s568 = sadd.s32 %s37, 1
        %s569 = smul.u32 %s568, 2
        %p570 = scmp.lt.s32.totalorder %s569, 1
        %s571 = scalar_select %p570, %s569, 1
        %s572 = sadd.s32 %s37, 1
        %s573 = smul.u32 %s572, 2
        %p574 = scmp.lt.s32.totalorder %s573, 1
        %s575 = scalar_select %p574, %s573, 1
        %s576 = smul.u32 %s37, 16
        %v577 = vld [vmem:[%s453] sm:$0xff]
        %v578 = vld [vmem:[%s453 + $0x8] sm:$0xff]
        %v579 = vld [vmem:[%s463] sm:$0xff]
        %v580 = vld [vmem:[%s463 + $0x8] sm:$0xff]
        %v581 = vsub.f32 %v577, %v579
        %v582 = vsub.f32 %v578, %v580
        %s583 = scalar_lea.vmem %s453, 16 [#allocation2]
        %v584 = vld [vmem:[%s583] sm:$0xff]
        %v585 = vld [vmem:[%s583 + $0x8] sm:$0xff]
        %s586 = scalar_lea.vmem %s463, 16 [#allocation5]
        %v587 = vld [vmem:[%s586] sm:$0xff]
        %v588 = vld [vmem:[%s586 + $0x8] sm:$0xff]
        %v589 = vsub.f32 %v584, %v587
        %v590 = vsub.f32 %v585, %v588
        %v591 = vadd.f32 %v581, %v589
        %v592 = vadd.f32 %v582, %v590
        %s593 = scalar_lea.vmem %s453, 32 [#allocation2]
        %v594 = vld [vmem:[%s593] sm:$0xff]
        %v595 = vld [vmem:[%s593 + $0x8] sm:$0xff]
        %s596 = scalar_lea.vmem %s463, 32 [#allocation5]
        %v597 = vld [vmem:[%s596] sm:$0xff]
        %v598 = vld [vmem:[%s596 + $0x8] sm:$0xff]
        %v599 = vsub.f32 %v594, %v597
        %v600 = vsub.f32 %v595, %v598
        %v601 = vadd.f32 %v591, %v599
        %v602 = vadd.f32 %v592, %v600
        %v603 = vlaneseq
        %v604 = vshrl.u32 %v603, 7
        %v605 = vadd.s32 %v604, 8
        %v606 = vstv %s576
        %v607 = vadd.s32 %v604, %v606
        %v608 = vadd.s32 %v605, %v606
        %vm609 = vcmp.lt.s32.totalorder %v607, 16
        %vm610 = vcmp.lt.s32.totalorder %v608, 16
        %v611 = vsel %vm609, %v601, 0.0
        %v612 = vsel %vm610, %v602, 0.0
        %v613 = vld [vmem:[%s473] sm:$0xff]
        %v614 = vld [vmem:[%s483] sm:$0xff]
        %v615 = vsub.f32 %v613, %v614
        %v616 = vld [vmem:[%s493] sm:$0xff]
        %v617 = vld [vmem:[%s503] sm:$0xff]
        %v618 = vsub.f32 %v616, %v617
        %s619 = scalar_lea.vmem %s473, 8 [#allocation7]
        %v620 = vld [vmem:[%s619] sm:$0xff]
        %s621 = scalar_lea.vmem %s483, 8 [#allocation8]
        %v622 = vld [vmem:[%s621] sm:$0xff]
        %v623 = vsub.f32 %v620, %v622
        %v624 = vadd.f32 %v615, %v623
        %s625 = scalar_lea.vmem %s493, 8 [#allocation10]
        %v626 = vld [vmem:[%s625] sm:$0xff]
        %s627 = scalar_lea.vmem %s503, 8 [#allocation11]
        %v628 = vld [vmem:[%s627] sm:$0xff]
        %v629 = vsub.f32 %v626, %v628
        %v630 = vadd.f32 %v618, %v629
        %s631 = scalar_lea.vmem %s473, 16 [#allocation7]
        %v632 = vld [vmem:[%s631] sm:$0xff]
        %s633 = scalar_lea.vmem %s483, 16 [#allocation8]
        %v634 = vld [vmem:[%s633] sm:$0xff]
        %v635 = vsub.f32 %v632, %v634
        %v636 = vadd.f32 %v624, %v635
        %s637 = scalar_lea.vmem %s493, 16 [#allocation10]
        %v638 = vld [vmem:[%s637] sm:$0xff]
        %s639 = scalar_lea.vmem %s503, 16 [#allocation11]
        %v640 = vld [vmem:[%s639] sm:$0xff]
        %v641 = vsub.f32 %v638, %v640
        %v642 = vadd.f32 %v630, %v641
        %p643 = scmp.gt.s32.totalorder %s576, 0
        %s644 = scalar_select %p643, 1, 0
        %v645 = vstv %s644
        %vm646 = vcmp.eq.s32.totalorder %v645, 1
        %v647 = vsel %vm646, %v636, 0.0
        %s648 = sadd.s32 %s576, 16
        %p649 = scmp.lt.s32.totalorder %s648, 16
        %s650 = scalar_select %p649, 1, 0
        %v651 = vstv %s650
        %vm652 = vcmp.eq.s32.totalorder %v651, 1
        %v653 = vsel %vm652, %v642, 0.0
        %v655 = vrot.slane %v647, 7
        %vm659 = vcmask 1040384
        %v660 = vrot.slane %v611, 7
        %v661 = vrot.slane %v612, 7
        %v662 = vsel %vm659, %v660, %v661
        %v667 = vrot.slane %v653, 7
        %v669 = vsel %vm659, %v655, %v660
        %v670 = vsel %vm659, %v661, %v667
        %vm671 = vcmask 130048
        %v672 = vsel %vm671, %v669, 0.0
        %v673 = vsel %vm671, %v662, 0.0
        %v674 = vsel %vm671, %v670, 0.0
        %675 = vrot.lane.b32.xlu0 %v672, 1
        %v676 = vpop.permute.xlu0 %675
        %677 = vrot.lane.b32.xlu0 %v673, 1
        %v678 = vpop.permute.xlu0 %677
        %679 = vrot.lane.b32.xlu0 %v674, 1
        %v680 = vpop.permute.xlu0 %679
        %v681 = vadd.f32 %v672, %v676
        %v682 = vadd.f32 %v673, %v678
        %v683 = vadd.f32 %v674, %v680
        %684 = vrot.lane.b32.xlu0 %v672, 127
        %v685 = vpop.permute.xlu0 %684
        %686 = vrot.lane.b32.xlu0 %v673, 127
        %v687 = vpop.permute.xlu0 %686
        %688 = vrot.lane.b32.xlu0 %v674, 127
        %v689 = vpop.permute.xlu0 %688
        %v690 = vadd.f32 %v681, %v685
        %v691 = vadd.f32 %v682, %v687
        %v692 = vadd.f32 %v683, %v689
        %vm696 = vcmask 1046528
        %v697 = vrot.slane %v690, 1
        %v698 = vrot.slane %v691, 1
        %v699 = vsel %vm696, %v697, %v698
        %v700 = vrot.slane %v692, 1
        %v701 = vsel %vm696, %v698, %v700
        %v704 = vadd.f32 %v690, %v699
        %v705 = vadd.f32 %v691, %v701
        %vm706 = vcmask 1045504
        %v707 = vrot.slane %v690, 2
        %v708 = vrot.slane %v691, 2
        %v709 = vsel %vm706, %v707, %v708
        %v710 = vrot.slane %v692, 2
        %v711 = vsel %vm706, %v708, %v710
        %v714 = vadd.f32 %v704, %v709
        %v715 = vadd.f32 %v705, %v711
        %v716 = vmul.f32 %v672, 9.0
        %v717 = vmul.f32 %v673, 9.0
        %v718 = vmul.f32 %v674, 9.0
        %v721 = vrot.slane %v714, 7
        %v722 = vrot.slane %v715, 7
        %v723 = vsel %vm659, %v721, %v722
        %v727 = vsub.f32 %v716, %v721
        %v728 = vsub.f32 %v717, %v723
        %v729 = vsub.f32 %v718, %v722
        %v730 = vlaneseq
        %v731 = vand.u32 %v730, 127
        %vm732 = vcmp.lt.s32.totalorder %v731, 16
        %vm733 = vmand %vm609, %vm732
        %vm734 = vmand %vm610, %vm732
        %v735 = vmul.f32 %v727, %v727
        %v736 = vmul.f32 %v728, %v728
        %v737 = vmul.f32 %v729, %v729
        %v741 = vrot.slane %v735, 1
        %v742 = vrot.slane %v736, 1
        %v743 = vsel %vm696, %v741, %v742
        %v744 = vrot.slane %v737, 1
        %v745 = vsel %vm696, %v742, %v744
        %v748 = vsel %vm733, %v743, 0.0
        %v749 = vsel %vm734, %v745, 0.0
        %v750 = vadd.f32 %v748, %v749
        %751 = vst [vmem:[%s557] sm:$0xff] %v750
        %s752 = sand.u32 %s254, 1
        %s753 = scalar_lea.sflag [#allocation4], %s752
        %s754 = sand.u32 %s254, 1
        %s755 = smul.addr %s754, 8
        %s756 = scalar_lea.vmem [#allocation13], %s755
        // Predicated region
        $region69: #{tpu_custom_call.1} parent=43 // pred_check
          %p757 = pneg %p264
        $region70: #{tpu_custom_call.1} parent=43 // pred_check_branch
          %759 = sbr.rel (%p757) target = $region72
        $region71: #{tpu_custom_call.1} parent=43 // pred_region
          %761 = vsyncadd %s753, 0
          %s762 = sadd.s32 %s37, %s36
          %s763 = smul.addr %s762, 8
          %s764 = scalar_lea.hbm %s6, %s763
          %s766 = sshll.u32 %s756, 4
          %s767 = int_to_ptr.vmem [resolvable:$true] %s766
          %s768 = sshll.u32 %s764, 4
          %s769 = int_to_ptr.hbm [resolvable:$true] %s768
          %771 = dma.vmem_to_hbm [thread:$0]  %s767, 128, %s769, %s753
        $region72: #{tpu_custom_call.1} parent=43 // pred_fallthru
          _
      $region44: #{tpu_custom_call.1} parent=5 // pred_fallthru
        _
      %p772 = scmp.le.s32.totalorder 2, %s27
      // Predicated region
      $region73: #{tpu_custom_call.1} parent=5 // pred_check
        %p773 = pneg %p772
      $region74: #{tpu_custom_call.1} parent=5 // pred_check_branch
        %775 = sbr.rel (%p773) target = $region76
      $region75: #{tpu_custom_call.1} parent=5 // pred_region
        %s776 = ssub.s32 %s27, 2
        // Predicated region
        $region77: #{tpu_custom_call.1} parent=75 // pred_check
          %p777 = pneg %p270
        $region78: #{tpu_custom_call.1} parent=75 // pred_check_branch
          %779 = sbr.rel (%p777) target = $region80
        $region79: #{tpu_custom_call.1} parent=75 // pred_region
          %s780 = sand.u32 %s255, 1
          %s781 = scalar_lea.sflag [#allocation4], %s780
          %s782 = sand.u32 %s255, 1
          %s783 = smul.addr %s782, 8
          %s784 = scalar_lea.vmem [#allocation13], %s783
          %786 = dma.done %s781, 128
        $region80: #{tpu_custom_call.1} parent=75 // pred_fallthru
          _
      $region76: #{tpu_custom_call.1} parent=5 // pred_fallthru
        _
    $region6: #{tpu_custom_call.1} parent=1 // loop_footer
      %s31 = sadd.s32 1, %s27
    $region7: #{tpu_custom_call.1} parent=1 // loop_footer_branch
      %26 = sbr.rel target = $region3
    $region8: #{tpu_custom_call.1} parent=1 // loop_exit
      _
    %787 = vsyncpa [#allocation3], 1
    %s788 = scalar_lea.sflag [#allocation3], 1
    %789 = vsyncpa %s788, 1
    %790 = vsyncpa [#allocation6], 1
    %s791 = scalar_lea.sflag [#allocation6], 1
    %792 = vsyncpa %s791, 1
    %793 = vsyncpa [#allocation9], 1
    %s794 = scalar_lea.sflag [#allocation9], 1
    %795 = vsyncpa %s794, 1
    %796 = vsyncpa [#allocation12], 1
    %s797 = scalar_lea.sflag [#allocation12], 1
    %798 = vsyncpa %s797, 1
    %799 = vsyncpa [#allocation4], 1
    %s800 = scalar_lea.sflag [#allocation4], 1
    %801 = vsyncpa %s800, 1

</llo_original>
